<compile_context>
chip_gen: v7x
topology: tpu7x:2x2x1
jax: 0.10.0
libtpu: 0.0.40
codegen_flags: <defaults>
</compile_context>

<pallas_src>
import jax
import jax.numpy as jnp
from jax import lax
from jax.experimental import pallas as pl
from jax.experimental.pallas import tpu as pltpu


def _round_up(x, m):
    return ((x + m - 1) // m) * m


def _cdiv(a, b):
    return -(-a // b)


def _make_rnn_kernel(TC, B_BLK, I, S_LAST):
    """Chunked recurrence + per-chunk FC kernel (static shapes baked in)."""
    unrolled = TC <= 32

    def kernel(x_ref, wih_ref, bias_ref, whh_ref, fcw_ref, fcb_ref, h0_ref,
               fc_ref, hlast_ref, h_carry, buf):
        c = pl.program_id(1)                       # time-chunk index (innermost)

        @pl.when(c == 0)
        def _():                                   # new batch block: load h0 slice
            h_carry[...] = h0_ref[...]

        # Loop-invariant operands, loaded once per chunk.  W_hh stays resident so
        # Mosaic can keep the MXU RHS staged across the (unrolled) steps.
        whh = whh_ref[...]                         # (H_pad, H_pad)  f32 or bf16
        wih = wih_ref[...]                         # (I, H_pad)      f32
        bias = bias_ref[...]                       # (1, H_pad)      f32 (b_ih+b_hh)

        def mm(a, w):                              # MXU dot, f32 accumulation
            return jnp.dot(a.astype(w.dtype), w, preferred_element_type=jnp.float32)

        def step(s, h):
            # Per-step input projection: tiny VPU broadcast-mul/adds that do not
            # depend on h, so they overlap the recurrence matmul.  (For a large
            # input_size this would become one per-chunk MXU matmul instead.)
            xs = x_ref[s]                          # (B_BLK, I)
            xp = bias
            for i in range(I):
                xp = xp + xs[:, i:i + 1] * wih[i:i + 1, :]
            h = jnp.tanh(xp + mm(h, whh))          # serial chain: MXU + tanh only
            row = s * B_BLK
            if not isinstance(row, int):
                row = pl.multiple_of(row, B_BLK)
            buf[pl.ds(row, B_BLK), :] = h          # stash for the per-chunk FC
            return h

        h = h_carry[...]
        if unrolled:
            for s in range(TC):
                h = step(s, h)
        else:
            h = lax.fori_loop(0, TC, step, h, unroll=8)
        h_carry[...] = h

        # One batched FC matmul per chunk: (TC*B_BLK, H_pad) x (H_pad, O) + b_fc.
        fc = mm(buf[...], fcw_ref[...]) + fcb_ref[...]
        fc_ref[...] = fc.astype(fc_ref.dtype)

        # The true last hidden state lives at a static row of the final chunk's
        # buffer (no per-step masking; padded steps only produced discarded rows).
        @pl.when(c == pl.num_programs(1) - 1)
        def _():
            hlast_ref[...] = buf[pl.ds(S_LAST * B_BLK, B_BLK), :]

    return kernel


def rnn_forward(params, input_data, hidden_state=None, *,
                time_chunk=256, batch_blocks=1, matmul_dtype=jnp.float32):
    """Mirrors RNN.forward (single-layer tanh RNN, batch_first, + Linear).

    input_data  : (B, T, input_size)
    hidden_state: None or (num_layers=1, B, H)
    returns (out, h_s): out (B*T, output_size), h_s (1, B, H)

    batch_blocks=2  -> splits the batch over a "parallel" grid axis (v7x 2nd core).
    matmul_dtype=jnp.bfloat16 -> bf16 MXU operands, f32 accumulate/carry (v6e/v7x).
    """
    w_ih, w_hh, b_ih, b_hh, fc_w, fc_b = params
    B, T, I = input_data.shape
    H = w_hh.shape[0]
    O = fc_w.shape[0]
    f32 = jnp.float32

    # TPU-friendly padded sizes (sublane multiple of 8 -- 16 for packed bf16 LHS --
    # lane multiple of 128).  Zero-padded H lanes provably stay zero through the
    # recurrence (tanh(0)=0, zero-padded W_hh rows/cols), so results are exact.
    sub = 8 if matmul_dtype == jnp.float32 else 16
    NB = max(1, int(batch_blocks))
    B_BLK = _round_up(_cdiv(B, NB), sub)
    B_pad = NB * B_BLK
    H_pad = _round_up(H, 128)

    TC = min(time_chunk, T)
    NC = _cdiv(T, TC)
    T_pad = NC * TC
    S_LAST = (T - 1) - (NC - 1) * TC              # static row of the last valid step

    # Transposed, zero-padded weights.  W_hh / W_fc optionally cast to bf16.
    wih_t = jnp.zeros((I, H_pad), f32).at[:, :H].set(jnp.transpose(w_ih).astype(f32))
    bias = jnp.zeros((1, H_pad), f32).at[0, :H].set((b_ih + b_hh).astype(f32))
    whh_t = (jnp.zeros((H_pad, H_pad), f32)
             .at[:H, :H].set(jnp.transpose(w_hh).astype(f32)).astype(matmul_dtype))
    fcw_t = (jnp.zeros((H_pad, O), f32)
             .at[:H, :].set(jnp.transpose(fc_w).astype(f32)).astype(matmul_dtype))
    fcb = fc_b.reshape(1, O).astype(f32)

    # Raw input in time-major layout -- only O(T*B*I) bytes of HBM input traffic.
    x_tm = jnp.transpose(input_data.astype(f32), (1, 0, 2))
    x_tm = jnp.pad(x_tm, ((0, T_pad - T), (0, B_pad - B), (0, 0)))

    if hidden_state is None:
        h0 = jnp.zeros((B_pad, H_pad), f32)
    else:
        h0 = jnp.zeros((B_pad, H_pad), f32).at[:B, :H].set(
            hidden_state.reshape(B, H).astype(f32))

    kernel = _make_rnn_kernel(TC, B_BLK, I, S_LAST)

    fc_out, h_last = pl.pallas_call(
        kernel,
        out_shape=(
            jax.ShapeDtypeStruct((NB * T_pad * B_BLK, O), f32),
            jax.ShapeDtypeStruct((B_pad, H_pad), f32),
        ),
        grid_spec=pltpu.PrefetchScalarGridSpec(
            num_scalar_prefetch=0,
            grid=(NB, NC),                          # batch blocks (parallel) x chunks
            in_specs=[
                pl.BlockSpec((TC, B_BLK, I), lambda b, c: (c, b, 0)),   # raw x chunk
                pl.BlockSpec((I, H_pad), lambda b, c: (0, 0)),          # W_ih^T
                pl.BlockSpec((1, H_pad), lambda b, c: (0, 0)),          # b_ih + b_hh
                pl.BlockSpec((H_pad, H_pad), lambda b, c: (0, 0)),      # W_hh^T
                pl.BlockSpec((H_pad, O), lambda b, c: (0, 0)),          # W_fc^T
                pl.BlockSpec((1, O), lambda b, c: (0, 0)),              # b_fc
                pl.BlockSpec((B_BLK, H_pad), lambda b, c: (b, 0)),      # h0 slice
            ],
            out_specs=[
                pl.BlockSpec((TC * B_BLK, O), lambda b, c: (b * NC + c, 0)),  # fc
                pl.BlockSpec((B_BLK, H_pad), lambda b, c: (b, 0)),            # h_last
            ],
            scratch_shapes=[
                pltpu.VMEM((B_BLK, H_pad), f32),            # carried hidden state
                pltpu.VMEM((TC * B_BLK, H_pad), f32),       # chunk hidden-state buf
            ],
        ),
        compiler_params=pltpu.CompilerParams(
            dimension_semantics=("parallel", "arbitrary")),  # time stays sequential
    )(x_tm, wih_t, bias, whh_t, fcw_t, fcb, h0)

    # PyTorch: output.view(-1, hidden_size) on a batch_first tensor -> batch-major rows.
    fc_tbo = fc_out.reshape(NB, T_pad, B_BLK, O)[:, :T]           # (NB, T, B_BLK, O)
    out = (jnp.transpose(fc_tbo, (0, 2, 1, 3))                    # (NB, B_BLK, T, O)
           .reshape(B_pad, T, O)[:B].reshape(B * T, O))
    h_s = h_last[:B, :H].reshape(1, B, H)
    return out, h_s


def _ref_rnn(params, x, h0=None):
    """Pure-JAX reference for correctness."""
    w_ih, w_hh, b_ih, b_hh, fc_w, fc_b = params
    B, T, _ = x.shape
    H = w_hh.shape[0]
    h = (jnp.zeros((B, H), jnp.float32) if h0 is None
         else h0.reshape(B, H).astype(jnp.float32))
    hs = []
    for t in range(T):
        h = jnp.tanh(x[:, t, :] @ w_ih.T + b_ih + h @ w_hh.T + b_hh)
        hs.append(h)
    seq = jnp.stack(hs, axis=1)                       # (B, T, H)
    out = seq.reshape(B * T, H) @ fc_w.T + fc_b       # (B*T, O)
    return out, h[None]


if __name__ == "__main__":
    # Shapes consistent with the module: input_size=1, output_size=1, hidden=100.
    H, I, O = 100, 1, 1
    key = jax.random.PRNGKey(0)
    keys = jax.random.split(key, 9)
    k = 1.0 / (H ** 0.5)
    # Deterministic init, matching PyTorch's U(-1/sqrt(H), 1/sqrt(H)) scheme.
    w_ih = jax.random.uniform(keys[0], (H, I), jnp.float32, -k, k)
    w_hh = jax.random.uniform(keys[1], (H, H), jnp.float32, -k, k)
    b_ih = jax.random.uniform(keys[2], (H,), jnp.float32, -k, k)
    b_hh = jax.random.uniform(keys[3], (H,), jnp.float32, -k, k)
    fc_w = jax.random.uniform(keys[4], (O, H), jnp.float32, -k, k)
    fc_b = jax.random.uniform(keys[5], (O,), jnp.float32, -k, k)
    params = (w_ih, w_hh, b_ih, b_hh, fc_w, fc_b)

    # --- Test 1: spec shapes (B=2, T=10), multi-chunk + time remainder, unrolled. ---
    x1 = jax.random.normal(keys[6], (2, 10, I), jnp.float32)
    out1, hs1 = rnn_forward(params, x1, None, time_chunk=4)
    jax.block_until_ready((out1, hs1))
    ro1, rh1 = _ref_rnn(params, x1)
    assert out1.shape == (2 * 10, O) and hs1.shape == (1, 2, H)
    assert jnp.allclose(out1, ro1, atol=3e-5), "fc output mismatch (test 1)"
    assert jnp.allclose(hs1, rh1, atol=3e-5), "hidden state mismatch (test 1)"

    # --- Test 2: batch-blocked grid (v7x 2nd-core path), non-zero h0, batch pad. ---
    x2 = jax.random.normal(keys[7], (20, 7, I), jnp.float32)
    h02 = 0.1 * jax.random.normal(keys[8], (1, 20, H), jnp.float32)
    out2, hs2 = rnn_forward(params, x2, h02, time_chunk=8, batch_blocks=2)
    jax.block_until_ready((out2, hs2))
    ro2, rh2 = _ref_rnn(params, x2, h02)
    assert jnp.allclose(out2, ro2, atol=3e-5), "fc output mismatch (test 2)"
    assert jnp.allclose(hs2, rh2, atol=3e-5), "hidden state mismatch (test 2)"

    # --- Test 3: fori_loop path (TC > 32) with the default time_chunk. ---
    x3 = jax.random.normal(keys[7], (2, 40, I), jnp.float32)
    out3, hs3 = rnn_forward(params, x3, None)          # time_chunk=256 -> TC=40
    jax.block_until_ready((out3, hs3))
    ro3, rh3 = _ref_rnn(params, x3)
    assert jnp.allclose(out3, ro3, atol=3e-5), "fc output mismatch (test 3)"
    assert jnp.allclose(hs3, rh3, atol=3e-5), "hidden state mismatch (test 3)"

    # --- Test 4: bf16 MXU operands (v6e/v7x path), f32 accumulate -- loose check. ---
    out4, hs4 = rnn_forward(params, x1, None, time_chunk=4,
                            matmul_dtype=jnp.bfloat16)
    jax.block_until_ready((out4, hs4))
    assert jnp.allclose(out4, ro1, atol=0.15), "bf16 fc output drifted (test 4)"
    assert jnp.allclose(hs4, rh1, atol=0.15), "bf16 hidden state drifted (test 4)"

    print("KERNEL_OK")
</pallas_src>

<mosaic_0001>
module attributes {stable_mosaic.version = 11 : i64} {
  func.func @kernel(%arg0: i32, %arg1: i32, %arg2: memref<4x8x1xf32, #tpu.memory_space<vmem>>, %arg3: memref<1x128xf32, #tpu.memory_space<vmem>>, %arg4: memref<1x128xf32, #tpu.memory_space<vmem>>, %arg5: memref<128x128xf32, #tpu.memory_space<vmem>>, %arg6: memref<128x1xf32, #tpu.memory_space<vmem>>, %arg7: memref<1x1xf32, #tpu.memory_space<vmem>>, %arg8: memref<8x128xf32, #tpu.memory_space<vmem>>, %arg9: memref<32x1xf32, #tpu.memory_space<vmem>>, %arg10: memref<8x128xf32, #tpu.memory_space<vmem>>, %arg11: memref<8x128xf32, #tpu.memory_space<vmem>>, %arg12: memref<32x128xf32, #tpu.memory_space<vmem>>) attributes {dimension_semantics = [#tpu.dimension_semantics<parallel>, #tpu.dimension_semantics<arbitrary>], iteration_bounds = array<i64: 1, 3>, scalar_prefetch = 0 : i64, scratch_operands = 2 : i64, tpu.core_type = #tpu.core_type<tc>, window_params = [{transform_indices = @transform_0, window_bounds = array<i64: 4, 8, 1>}, {pipeline_mode = #tpu.pipeline_mode<synchronous>, transform_indices = @transform_1, window_bounds = array<i64: 1, 128>}, {pipeline_mode = #tpu.pipeline_mode<synchronous>, transform_indices = @transform_2, window_bounds = array<i64: 1, 128>}, {pipeline_mode = #tpu.pipeline_mode<synchronous>, transform_indices = @transform_3, window_bounds = array<i64: 128, 128>}, {pipeline_mode = #tpu.pipeline_mode<synchronous>, transform_indices = @transform_4, window_bounds = array<i64: 128, 1>}, {pipeline_mode = #tpu.pipeline_mode<synchronous>, transform_indices = @transform_5, window_bounds = array<i64: 1, 1>}, {transform_indices = @transform_6, window_bounds = array<i64: 8, 128>}, {transform_indices = @transform_7, window_bounds = array<i64: 32, 1>}, {transform_indices = @transform_8, window_bounds = array<i64: 8, 128>}]} {
    %c0_i32 = arith.constant 0 : i32
    %0 = arith.cmpi eq, %arg1, %c0_i32 : i32
    %1 = arith.extui %0 : i1 to i32
    %c0_i32_0 = arith.constant 0 : i32
    %2 = arith.cmpi ne, %1, %c0_i32_0 : i32
    scf.if %2 {
      %c0_37 = arith.constant 0 : index
      %c0_38 = arith.constant 0 : index
      %62 = vector.load %arg8[%c0_37, %c0_38] : memref<8x128xf32, #tpu.memory_space<vmem>>, vector<8x128xf32>
      %c0_39 = arith.constant 0 : index
      %c0_40 = arith.constant 0 : index
      %63 = vector.load %arg11[%c0_39, %c0_40] : memref<8x128xf32, #tpu.memory_space<vmem>>, vector<8x128xf32>
      tpu.vector_store %arg11[%c0_39, %c0_40], %62 {strides = array<i32>} : memref<8x128xf32, #tpu.memory_space<vmem>>, vector<8x128xf32>,
    } else {
    }
    %c0 = arith.constant 0 : index
    %c0_1 = arith.constant 0 : index
    %3 = vector.load %arg5[%c0, %c0_1] : memref<128x128xf32, #tpu.memory_space<vmem>>, vector<128x128xf32>
    %c0_2 = arith.constant 0 : index
    %c0_3 = arith.constant 0 : index
    %4 = vector.load %arg3[%c0_2, %c0_3] : memref<1x128xf32, #tpu.memory_space<vmem>>, vector<1x128xf32>
    %c0_4 = arith.constant 0 : index
    %c0_5 = arith.constant 0 : index
    %5 = vector.load %arg4[%c0_4, %c0_5] : memref<1x128xf32, #tpu.memory_space<vmem>>, vector<1x128xf32>
    %c0_6 = arith.constant 0 : index
    %c0_7 = arith.constant 0 : index
    %6 = vector.load %arg11[%c0_6, %c0_7] : memref<8x128xf32, #tpu.memory_space<vmem>>, vector<8x128xf32>
    %c0_8 = arith.constant 0 : index
    %c0_9 = arith.constant 0 : index
    %c0_10 = arith.constant 0 : index
    %7 = vector.load %arg2[%c0_8, %c0_9, %c0_10] : memref<4x8x1xf32, #tpu.memory_space<vmem>>, vector<1x8x1xf32>
    %8 = vector.shape_cast %7 : vector<1x8x1xf32> to vector<8x1xf32>
    %9 = vector.broadcast %8 : vector<8x1xf32> to vector<8x128xf32>
    %10 = vector.broadcast %4 : vector<1x128xf32> to vector<8x128xf32>
    %11 = arith.mulf %9, %10 : vector<8x128xf32>
    %12 = vector.broadcast %5 : vector<1x128xf32> to vector<8x128xf32>
    %13 = arith.addf %12, %11 : vector<8x128xf32>
    %cst = arith.constant dense<0.000000e+00> : vector<8x128xf32>
    %14 = tpu.matmul %6, %3, %cst {dimension_numbers = #tpu.dot_dimension_numbers<[1], [0], [0], [1], [0, 0, 1, 1], [], []>} : vector<8x128xf32>, vector<128x128xf32>, vector<8x128xf32> -> vector<8x128xf32>
    %15 = arith.addf %13, %14 : vector<8x128xf32>
    %16 = math.tanh %15 : vector<8x128xf32>
    %c0_11 = arith.constant 0 : index
    %c0_12 = arith.constant 0 : index
    %17 = vector.load %arg12[%c0_11, %c0_12] : memref<32x128xf32, #tpu.memory_space<vmem>>, vector<8x128xf32>
    tpu.vector_store %arg12[%c0_11, %c0_12], %16 {strides = array<i32>} : memref<32x128xf32, #tpu.memory_space<vmem>>, vector<8x128xf32>,
    %c1 = arith.constant 1 : index
    %c0_13 = arith.constant 0 : index
    %c0_14 = arith.constant 0 : index
    %18 = vector.load %arg2[%c1, %c0_13, %c0_14] : memref<4x8x1xf32, #tpu.memory_space<vmem>>, vector<1x8x1xf32>
    %19 = vector.shape_cast %18 : vector<1x8x1xf32> to vector<8x1xf32>
    %20 = vector.broadcast %19 : vector<8x1xf32> to vector<8x128xf32>
    %21 = vector.broadcast %4 : vector<1x128xf32> to vector<8x128xf32>
    %22 = arith.mulf %20, %21 : vector<8x128xf32>
    %23 = vector.broadcast %5 : vector<1x128xf32> to vector<8x128xf32>
    %24 = arith.addf %23, %22 : vector<8x128xf32>
    %cst_15 = arith.constant dense<0.000000e+00> : vector<8x128xf32>
    %25 = tpu.matmul %16, %3, %cst_15 {dimension_numbers = #tpu.dot_dimension_numbers<[1], [0], [0], [1], [0, 0, 1, 1], [], []>} : vector<8x128xf32>, vector<128x128xf32>, vector<8x128xf32> -> vector<8x128xf32>
    %26 = arith.addf %24, %25 : vector<8x128xf32>
    %27 = math.tanh %26 : vector<8x128xf32>
    %c8 = arith.constant 8 : index
    %c0_16 = arith.constant 0 : index
    %28 = vector.load %arg12[%c8, %c0_16] : memref<32x128xf32, #tpu.memory_space<vmem>>, vector<8x128xf32>
    tpu.vector_store %arg12[%c8, %c0_16], %27 {strides = array<i32>} : memref<32x128xf32, #tpu.memory_space<vmem>>, vector<8x128xf32>,
    %c2 = arith.constant 2 : index
    %c0_17 = arith.constant 0 : index
    %c0_18 = arith.constant 0 : index
    %29 = vector.load %arg2[%c2, %c0_17, %c0_18] : memref<4x8x1xf32, #tpu.memory_space<vmem>>, vector<1x8x1xf32>
    %30 = vector.shape_cast %29 : vector<1x8x1xf32> to vector<8x1xf32>
    %31 = vector.broadcast %30 : vector<8x1xf32> to vector<8x128xf32>
    %32 = vector.broadcast %4 : vector<1x128xf32> to vector<8x128xf32>
    %33 = arith.mulf %31, %32 : vector<8x128xf32>
    %34 = vector.broadcast %5 : vector<1x128xf32> to vector<8x128xf32>
    %35 = arith.addf %34, %33 : vector<8x128xf32>
    %cst_19 = arith.constant dense<0.000000e+00> : vector<8x128xf32>
    %36 = tpu.matmul %27, %3, %cst_19 {dimension_numbers = #tpu.dot_dimension_numbers<[1], [0], [0], [1], [0, 0, 1, 1], [], []>} : vector<8x128xf32>, vector<128x128xf32>, vector<8x128xf32> -> vector<8x128xf32>
    %37 = arith.addf %35, %36 : vector<8x128xf32>
    %38 = math.tanh %37 : vector<8x128xf32>
    %c16 = arith.constant 16 : index
    %c0_20 = arith.constant 0 : index
    %39 = vector.load %arg12[%c16, %c0_20] : memref<32x128xf32, #tpu.memory_space<vmem>>, vector<8x128xf32>
    tpu.vector_store %arg12[%c16, %c0_20], %38 {strides = array<i32>} : memref<32x128xf32, #tpu.memory_space<vmem>>, vector<8x128xf32>,
    %c3 = arith.constant 3 : index
    %c0_21 = arith.constant 0 : index
    %c0_22 = arith.constant 0 : index
    %40 = vector.load %arg2[%c3, %c0_21, %c0_22] : memref<4x8x1xf32, #tpu.memory_space<vmem>>, vector<1x8x1xf32>
    %41 = vector.shape_cast %40 : vector<1x8x1xf32> to vector<8x1xf32>
    %42 = vector.broadcast %41 : vector<8x1xf32> to vector<8x128xf32>
    %43 = vector.broadcast %4 : vector<1x128xf32> to vector<8x128xf32>
    %44 = arith.mulf %42, %43 : vector<8x128xf32>
    %45 = vector.broadcast %5 : vector<1x128xf32> to vector<8x128xf32>
    %46 = arith.addf %45, %44 : vector<8x128xf32>
    %cst_23 = arith.constant dense<0.000000e+00> : vector<8x128xf32>
    %47 = tpu.matmul %38, %3, %cst_23 {dimension_numbers = #tpu.dot_dimension_numbers<[1], [0], [0], [1], [0, 0, 1, 1], [], []>} : vector<8x128xf32>, vector<128x128xf32>, vector<8x128xf32> -> vector<8x128xf32>
    %48 = arith.addf %46, %47 : vector<8x128xf32>
    %49 = math.tanh %48 : vector<8x128xf32>
    %c24 = arith.constant 24 : index
    %c0_24 = arith.constant 0 : index
    %50 = vector.load %arg12[%c24, %c0_24] : memref<32x128xf32, #tpu.memory_space<vmem>>, vector<8x128xf32>
    tpu.vector_store %arg12[%c24, %c0_24], %49 {strides = array<i32>} : memref<32x128xf32, #tpu.memory_space<vmem>>, vector<8x128xf32>,
    %c0_25 = arith.constant 0 : index
    %c0_26 = arith.constant 0 : index
    %51 = vector.load %arg11[%c0_25, %c0_26] : memref<8x128xf32, #tpu.memory_space<vmem>>, vector<8x128xf32>
    tpu.vector_store %arg11[%c0_25, %c0_26], %49 {strides = array<i32>} : memref<8x128xf32, #tpu.memory_space<vmem>>, vector<8x128xf32>,
    %c0_27 = arith.constant 0 : index
    %c0_28 = arith.constant 0 : index
    %52 = vector.load %arg12[%c0_27, %c0_28] : memref<32x128xf32, #tpu.memory_space<vmem>>, vector<32x128xf32>
    %c0_29 = arith.constant 0 : index
    %c0_30 = arith.constant 0 : index
    %53 = vector.load %arg6[%c0_29, %c0_30] : memref<128x1xf32, #tpu.memory_space<vmem>>, vector<128x1xf32>
    %cst_31 = arith.constant dense<0.000000e+00> : vector<32x1xf32>
    %54 = tpu.matmul %52, %53, %cst_31 {dimension_numbers = #tpu.dot_dimension_numbers<[1], [0], [0], [1], [0, 0, 1, 1], [], []>} : vector<32x128xf32>, vector<128x1xf32>, vector<32x1xf32> -> vector<32x1xf32>
    %c0_32 = arith.constant 0 : index
    %c0_33 = arith.constant 0 : index
    %55 = vector.load %arg7[%c0_32, %c0_33] : memref<1x1xf32, #tpu.memory_space<vmem>>, vector<1x1xf32>
    %56 = vector.broadcast %55 : vector<1x1xf32> to vector<32x1xf32>
    %57 = arith.addf %54, %56 : vector<32x1xf32>
    %c0_34 = arith.constant 0 : index
    %c0_35 = arith.constant 0 : index
    %58 = vector.load %arg9[%c0_34, %c0_35] : memref<32x1xf32, #tpu.memory_space<vmem>>, vector<32x1xf32>
    tpu.vector_store %arg9[%c0_34, %c0_35], %57 {strides = array<i32>} : memref<32x1xf32, #tpu.memory_space<vmem>>, vector<32x1xf32>,
    %c2_i32 = arith.constant 2 : i32
    %59 = arith.cmpi eq, %arg1, %c2_i32 : i32
    %60 = arith.extui %59 : i1 to i32
    %c0_i32_36 = arith.constant 0 : i32
    %61 = arith.cmpi ne, %60, %c0_i32_36 : i32
    scf.if %61 {
      %c8_37 = arith.constant 8 : index
      %c0_38 = arith.constant 0 : index
      %62 = vector.load %arg12[%c8_37, %c0_38] : memref<32x128xf32, #tpu.memory_space<vmem>>, vector<8x128xf32>
      %c0_39 = arith.constant 0 : index
      %c0_40 = arith.constant 0 : index
      %63 = vector.load %arg10[%c0_39, %c0_40] : memref<8x128xf32, #tpu.memory_space<vmem>>, vector<8x128xf32>
      tpu.vector_store %arg10[%c0_39, %c0_40], %62 {strides = array<i32>} : memref<8x128xf32, #tpu.memory_space<vmem>>, vector<8x128xf32>,
    } else {
    }
    return
  }
  func.func @transform_0(%arg0: i32, %arg1: i32) -> (i32, i32, i32) {
    %c0_i32 = arith.constant 0 : i32
    %c0_i32_0 = arith.constant 0 : i32
    return %arg1, %arg0, %c0_i32 : i32, i32, i32
  }
  func.func @transform_1(%arg0: i32, %arg1: i32) -> (i32, i32) {
    %c0_i32 = arith.constant 0 : i32
    %c0_i32_0 = arith.constant 0 : i32
    %c0_i32_1 = arith.constant 0 : i32
    return %c0_i32, %c0_i32_0 : i32, i32
  }
  func.func @transform_2(%arg0: i32, %arg1: i32) -> (i32, i32) {
    %c0_i32 = arith.constant 0 : i32
    %c0_i32_0 = arith.constant 0 : i32
    %c0_i32_1 = arith.constant 0 : i32
    return %c0_i32, %c0_i32_0 : i32, i32
  }
  func.func @transform_3(%arg0: i32, %arg1: i32) -> (i32, i32) {
    %c0_i32 = arith.constant 0 : i32
    %c0_i32_0 = arith.constant 0 : i32
    %c0_i32_1 = arith.constant 0 : i32
    return %c0_i32, %c0_i32_0 : i32, i32
  }
  func.func @transform_4(%arg0: i32, %arg1: i32) -> (i32, i32) {
    %c0_i32 = arith.constant 0 : i32
    %c0_i32_0 = arith.constant 0 : i32
    %c0_i32_1 = arith.constant 0 : i32
    return %c0_i32, %c0_i32_0 : i32, i32
  }
  func.func @transform_5(%arg0: i32, %arg1: i32) -> (i32, i32) {
    %c0_i32 = arith.constant 0 : i32
    %c0_i32_0 = arith.constant 0 : i32
    %c0_i32_1 = arith.constant 0 : i32
    return %c0_i32, %c0_i32_0 : i32, i32
  }
  func.func @transform_6(%arg0: i32, %arg1: i32) -> (i32, i32) {
    %c0_i32 = arith.constant 0 : i32
    %c0_i32_0 = arith.constant 0 : i32
    return %arg0, %c0_i32 : i32, i32
  }
  func.func @transform_7(%arg0: i32, %arg1: i32) -> (i32, i32) {
    %c3_i32 = arith.constant 3 : i32
    %0 = arith.muli %arg0, %c3_i32 : i32
    %1 = arith.addi %0, %arg1 : i32
    %c0_i32 = arith.constant 0 : i32
    %c0_i32_0 = arith.constant 0 : i32
    return %1, %c0_i32 : i32, i32
  }
  func.func @transform_8(%arg0: i32, %arg1: i32) -> (i32, i32) {
    %c0_i32 = arith.constant 0 : i32
    %c0_i32_0 = arith.constant 0 : i32
    return %arg0, %c0_i32 : i32, i32
  }
}

</mosaic_0001>

<llo_original>
// kernel: tpu_custom_call.1
$region0: #{tpu_custom_call.1}
  #allocation0 [shape = 'u32[]', space=smem, size = 0x4, offset = 0x4, fixed_abs, tag = 'smem constant byte address 0x4 - core index']
  #allocation1 [shape = 'u32[144,128]{1,0:T(1,128)}', space=vmem, size = 0x12000, scoped, tag = 'internal scratch']
  #allocation2 [shape = 'f32[8,128]{1,0:T(8,128)}', space=vmem, size = 0x1000, scoped, tag = 'scratch operand']
  #allocation3 [shape = 'f32[32,128]{1,0:T(8,128)}', space=vmem, size = 0x4000, scoped, tag = 'scratch operand']
  #allocation4 [shape = 'f32[1,1]{1,0:T(1,128)S(1)}', space=vmem, size = 0x200, scoped, tag = 'scoped memory for tpu_custom_call.1']
  %s0 = inlined_call_operand.vmem [shape: f32[12,8,1], index: 0, kind: input, shape index: {}]
  %s1 = inlined_call_operand.vmem [shape: f32[1,128], index: 1, kind: input, shape index: {}]
  %s2 = inlined_call_operand.vmem [shape: f32[1,128], index: 2, kind: input, shape index: {}]
  %s3 = inlined_call_operand.vmem [shape: f32[128,128], index: 3, kind: input, shape index: {}]
  %s4 = inlined_call_operand.vmem [shape: f32[128,1], index: 4, kind: input, shape index: {}]
  %s5 = inlined_call_operand.<no memory space> [shape: f32[1,1], index: 5, kind: input, shape index: {}]
  %s6 = inlined_call_operand.vmem [shape: f32[8,128], index: 6, kind: input, shape index: {}]
  %s7 = inlined_call_operand.vmem [shape: f32[96,1], index: 7, kind: output, shape index: {0}]
  %s8 = inlined_call_operand.hbm [shape: f32[8,128], index: 8, kind: output, shape index: {1}]
  %9 = xla_tuple %s7, %s8
  %s10 = sld [smem:[#allocation0]]
  $region77: #{tpu_custom_call.1} parent=0
    _
  %s12 = ssub.s32 1, %s10
  %s13 = scalar_select 0, %s12, %s10
  %v14 = vstv %s5
  %15 = vst [vmem:[#allocation4] sm:$0x1] %v14
  $region1: #{tpu_custom_call.1} parent=0
    #allocation5 [shape = 'u8[4096]{0}', space=vmem, size = 0x1000, scoped, tag = 'output window, operand 1, single buffered']
    #allocation6 [shape = 's32[2]{0}', space=sflag, size = 0x8, scoped, tag = 'scoped memory for tpu_custom_call.1']
    %16 = vsyncpa [#allocation6], 0
    loop: start=0, step=1, limit=5
    $region2: #{tpu_custom_call.1} parent=1 // loop_pre_header
      _
    $region3: #{tpu_custom_call.1} parent=1 // loop_header
      %s18 = sphi 0, %s22
      %p19 = scmp.ge.s32.totalorder %s18, 5
      %s25 = sphi 0, %s37
      %s26 = sphi 0, %s33
      %s27 = sphi 0, %s25
      %s28 = sphi 0, %s26
      %s29 = sphi 0, %s27
      %s30 = sphi 0, %s28
      %s42 = sphi 0, %s44
      %s45 = sphi 0, %s42
      %s46 = sphi 0, %s45
      %s62 = sphi 0, %s46
      %s66 = sphi 0, %s66
      %s68 = sphi 0, %s66
      %s69 = sphi 0, %s68
      %s83 = sphi 0, %s69
      %s87 = sphi 0, %s87
      %s89 = sphi 0, %s87
      %s90 = sphi 0, %s89
      %s104 = sphi 0, %s90
      %s108 = sphi 0, %s108
      %s110 = sphi 0, %s108
      %s111 = sphi 0, %s110
      %s125 = sphi 0, %s111
      %s129 = sphi 0, %s129
      %s131 = sphi 0, %s129
      %s132 = sphi 0, %s131
      %s146 = sphi 0, %s132
      %s150 = sphi 0, %s150
      %s152 = sphi 0, %s150
      %s153 = sphi 0, %s152
      %s167 = sphi 0, %s153
      %s173 = sphi 0, %s175
      %s176 = sphi 0, %s173
      %s177 = sphi 0, %s176
      %s193 = sphi 0, %s177
      %s203 = sphi 0, %s205
      %s206 = sphi 0, %s203
      %s207 = sphi 0, %s206
      %s223 = sphi 0, %s207
      %s229 = sphi 0, %s231
      %s232 = sphi 0, %s229
      %s233 = sphi 0, %s232
      %s249 = sphi 0, %s233
    $region4: #{tpu_custom_call.1} parent=1 // loop_header_branch
      %21 = sbr.rel (%p19) target = $region8
    $region5: #{tpu_custom_call.1} parent=1 // loop_body
      %s23 = ssub.s32 %s18, 1
      %s24 = ssub.s32 %s18, 2
      %s31 = sadd.s32 1, %s26
      %p32 = scmp.ge.s32.totalorder %s31, 3
      %s33 = scalar_select %p32, 0, %s31
      %s34 = sadd.s32 1, %s25
      %s35 = scalar_select %p32, %s34, %s25
      %p36 = scmp.ge.s32.totalorder %s35, 1
      %s37 = scalar_select %p36, 0, %s35
      %s38 = ssub.s32 %s26, %s33
      %s39 = ssub.s32 %s25, %s37
      %s40 = sor.u32 %s38, %s39
      %p41 = scmp.eq.s32.totalorder %s40, 0
      %s43 = sadd.s32 %s42, 1
      %s44 = scalar_select %p41, %s42, %s43
      %p47 = pneg %p41
      %p48 = scmp.eq.s32.totalorder %s18, 2
      %p49 = por %p47, %p48
      %p50 = scmp.ne.s32.totalorder %s42, %s45
      %p51 = scmp.eq.s32.totalorder %s18, 0
      %p52 = por %p50, %p51
      %p53 = scmp.ne.s32.totalorder %s42, %s45
      %p54 = scmp.eq.s32.totalorder %s23, 2
      %p55 = por %p53, %p54
      %p56 = scmp.ne.s32.totalorder %s45, %s46
      %p57 = scmp.eq.s32.totalorder %s23, 0
      %p58 = por %p56, %p57
      %p59 = scmp.ne.s32.totalorder %s45, %s46
      %p60 = scmp.eq.s32.totalorder %s24, 2
      %p61 = por %p59, %p60
      %p63 = scmp.ne.s32.totalorder %s46, %s62
      %p64 = scmp.eq.s32.totalorder %s24, 0
      %p65 = por %p63, %p64
      %s67 = sadd.s32 %s66, 1
      %p70 = scmp.eq.s32.totalorder %s18, 2
      %p71 = scmp.ne.s32.totalorder %s66, %s68
      %p72 = scmp.eq.s32.totalorder %s18, 0
      %p73 = por %p71, %p72
      %p74 = scmp.ne.s32.totalorder %s66, %s68
      %p75 = scmp.eq.s32.totalorder %s23, 2
      %p76 = por %p74, %p75
      %p77 = scmp.ne.s32.totalorder %s68, %s69
      %p78 = scmp.eq.s32.totalorder %s23, 0
      %p79 = por %p77, %p78
      %p80 = scmp.ne.s32.totalorder %s68, %s69
      %p81 = scmp.eq.s32.totalorder %s24, 2
      %p82 = por %p80, %p81
      %p84 = scmp.ne.s32.totalorder %s69, %s83
      %p85 = scmp.eq.s32.totalorder %s24, 0
      %p86 = por %p84, %p85
      %s88 = sadd.s32 %s87, 1
      %p91 = scmp.eq.s32.totalorder %s18, 2
      %p92 = scmp.ne.s32.totalorder %s87, %s89
      %p93 = scmp.eq.s32.totalorder %s18, 0
      %p94 = por %p92, %p93
      %p95 = scmp.ne.s32.totalorder %s87, %s89
      %p96 = scmp.eq.s32.totalorder %s23, 2
      %p97 = por %p95, %p96
      %p98 = scmp.ne.s32.totalorder %s89, %s90
      %p99 = scmp.eq.s32.totalorder %s23, 0
      %p100 = por %p98, %p99
      %p101 = scmp.ne.s32.totalorder %s89, %s90
      %p102 = scmp.eq.s32.totalorder %s24, 2
      %p103 = por %p101, %p102
      %p105 = scmp.ne.s32.totalorder %s90, %s104
      %p106 = scmp.eq.s32.totalorder %s24, 0
      %p107 = por %p105, %p106
      %s109 = sadd.s32 %s108, 1
      %p112 = scmp.eq.s32.totalorder %s18, 2
      %p113 = scmp.ne.s32.totalorder %s108, %s110
      %p114 = scmp.eq.s32.totalorder %s18, 0
      %p115 = por %p113, %p114
      %p116 = scmp.ne.s32.totalorder %s108, %s110
      %p117 = scmp.eq.s32.totalorder %s23, 2
      %p118 = por %p116, %p117
      %p119 = scmp.ne.s32.totalorder %s110, %s111
      %p120 = scmp.eq.s32.totalorder %s23, 0
      %p121 = por %p119, %p120
      %p122 = scmp.ne.s32.totalorder %s110, %s111
      %p123 = scmp.eq.s32.totalorder %s24, 2
      %p124 = por %p122, %p123
      %p126 = scmp.ne.s32.totalorder %s111, %s125
      %p127 = scmp.eq.s32.totalorder %s24, 0
      %p128 = por %p126, %p127
      %s130 = sadd.s32 %s129, 1
      %p133 = scmp.eq.s32.totalorder %s18, 2
      %p134 = scmp.ne.s32.totalorder %s129, %s131
      %p135 = scmp.eq.s32.totalorder %s18, 0
      %p136 = por %p134, %p135
      %p137 = scmp.ne.s32.totalorder %s129, %s131
      %p138 = scmp.eq.s32.totalorder %s23, 2
      %p139 = por %p137, %p138
      %p140 = scmp.ne.s32.totalorder %s131, %s132
      %p141 = scmp.eq.s32.totalorder %s23, 0
      %p142 = por %p140, %p141
      %p143 = scmp.ne.s32.totalorder %s131, %s132
      %p144 = scmp.eq.s32.totalorder %s24, 2
      %p145 = por %p143, %p144
      %p147 = scmp.ne.s32.totalorder %s132, %s146
      %p148 = scmp.eq.s32.totalorder %s24, 0
      %p149 = por %p147, %p148
      %s151 = sadd.s32 %s150, 1
      %p154 = scmp.eq.s32.totalorder %s18, 2
      %p155 = scmp.ne.s32.totalorder %s150, %s152
      %p156 = scmp.eq.s32.totalorder %s18, 0
      %p157 = por %p155, %p156
      %p158 = scmp.ne.s32.totalorder %s150, %s152
      %p159 = scmp.eq.s32.totalorder %s23, 2
      %p160 = por %p158, %p159
      %p161 = scmp.ne.s32.totalorder %s152, %s153
      %p162 = scmp.eq.s32.totalorder %s23, 0
      %p163 = por %p161, %p162
      %p164 = scmp.ne.s32.totalorder %s152, %s153
      %p165 = scmp.eq.s32.totalorder %s24, 2
      %p166 = por %p164, %p165
      %p168 = scmp.ne.s32.totalorder %s153, %s167
      %p169 = scmp.eq.s32.totalorder %s24, 0
      %p170 = por %p168, %p169
      %s171 = ssub.s32 %s25, %s37
      %p172 = scmp.eq.s32.totalorder %s171, 0
      %s174 = sadd.s32 %s173, 1
      %s175 = scalar_select %p172, %s173, %s174
      %p178 = pneg %p172
      %p179 = scmp.eq.s32.totalorder %s18, 2
      %p180 = por %p178, %p179
      %p181 = scmp.ne.s32.totalorder %s173, %s176
      %p182 = scmp.eq.s32.totalorder %s18, 0
      %p183 = por %p181, %p182
      %p184 = scmp.ne.s32.totalorder %s173, %s176
      %p185 = scmp.eq.s32.totalorder %s23, 2
      %p186 = por %p184, %p185
      %p187 = scmp.ne.s32.totalorder %s176, %s177
      %p188 = scmp.eq.s32.totalorder %s23, 0
      %p189 = por %p187, %p188
      %p190 = scmp.ne.s32.totalorder %s176, %s177
      %p191 = scmp.eq.s32.totalorder %s24, 2
      %p192 = por %p190, %p191
      %p194 = scmp.ne.s32.totalorder %s177, %s193
      %p195 = scmp.eq.s32.totalorder %s24, 0
      %p196 = por %p194, %p195
      %s197 = smul.u32 %s25, 3
      %s198 = sadd.s32 %s197, %s26
      %s199 = smul.u32 %s37, 3
      %s200 = sadd.s32 %s199, %s33
      %s201 = ssub.s32 %s198, %s200
      %p202 = scmp.eq.s32.totalorder %s201, 0
      %s204 = sadd.s32 %s203, 1
      %s205 = scalar_select %p202, %s203, %s204
      %p208 = pneg %p202
      %p209 = scmp.eq.s32.totalorder %s18, 2
      %p210 = por %p208, %p209
      %p211 = scmp.ne.s32.totalorder %s203, %s206
      %p212 = scmp.eq.s32.totalorder %s18, 0
      %p213 = por %p211, %p212
      %p214 = scmp.ne.s32.totalorder %s203, %s206
      %p215 = scmp.eq.s32.totalorder %s23, 2
      %p216 = por %p214, %p215
      %p217 = scmp.ne.s32.totalorder %s206, %s207
      %p218 = scmp.eq.s32.totalorder %s23, 0
      %p219 = por %p217, %p218
      %p220 = scmp.ne.s32.totalorder %s206, %s207
      %p221 = scmp.eq.s32.totalorder %s24, 2
      %p222 = por %p220, %p221
      %p224 = scmp.ne.s32.totalorder %s207, %s223
      %p225 = scmp.eq.s32.totalorder %s24, 0
      %p226 = por %p224, %p225
      %s227 = ssub.s32 %s25, %s37
      %p228 = scmp.eq.s32.totalorder %s227, 0
      %s230 = sadd.s32 %s229, 1
      %s231 = scalar_select %p228, %s229, %s230
      %p234 = pneg %p228
      %p235 = scmp.eq.s32.totalorder %s18, 2
      %p236 = por %p234, %p235
      %p237 = scmp.ne.s32.totalorder %s229, %s232
      %p238 = scmp.eq.s32.totalorder %s18, 0
      %p239 = por %p237, %p238
      %p240 = scmp.ne.s32.totalorder %s229, %s232
      %p241 = scmp.eq.s32.totalorder %s23, 2
      %p242 = por %p240, %p241
      %p243 = scmp.ne.s32.totalorder %s232, %s233
      %p244 = scmp.eq.s32.totalorder %s23, 0
      %p245 = por %p243, %p244
      %p246 = scmp.ne.s32.totalorder %s232, %s233
      %p247 = scmp.eq.s32.totalorder %s24, 2
      %p248 = por %p246, %p247
      %p250 = scmp.ne.s32.totalorder %s233, %s249
      %p251 = scmp.eq.s32.totalorder %s24, 0
      %p252 = por %p250, %p251
      %p253 = scmp.le.s32.totalorder 1, %s18
      %p254 = scmp.lt.s32.totalorder %s18, 4
      %p255 = pnand %p253, %p254
      %p256 = pneg %p255
      // Predicated region
      $region9: #{tpu_custom_call.1} parent=5 // pred_check
        _
      $region10: #{tpu_custom_call.1} parent=5 // pred_check_branch
        %258 = sbr.rel (%p255) target = $region12
      $region11: #{tpu_custom_call.1} parent=5 // pred_region
        %s259 = ssub.s32 %s18, 1
        // Predicated region
        $region13: #{tpu_custom_call.1} parent=11 // pred_check
          %p260 = pneg %p79
        $region14: #{tpu_custom_call.1} parent=11 // pred_check_branch
          %262 = sbr.rel (%p260) target = $region16
        $region15: #{tpu_custom_call.1} parent=11 // pred_region
          _
        $region16: #{tpu_custom_call.1} parent=11 // pred_fallthru
          _
        // Predicated region
        $region17: #{tpu_custom_call.1} parent=11 // pred_check
          %p263 = pneg %p100
        $region18: #{tpu_custom_call.1} parent=11 // pred_check_branch
          %265 = sbr.rel (%p263) target = $region20
        $region19: #{tpu_custom_call.1} parent=11 // pred_region
          _
        $region20: #{tpu_custom_call.1} parent=11 // pred_fallthru
          _
        // Predicated region
        $region21: #{tpu_custom_call.1} parent=11 // pred_check
          %p266 = pneg %p121
        $region22: #{tpu_custom_call.1} parent=11 // pred_check_branch
          %268 = sbr.rel (%p266) target = $region24
        $region23: #{tpu_custom_call.1} parent=11 // pred_region
          _
        $region24: #{tpu_custom_call.1} parent=11 // pred_fallthru
          _
        // Predicated region
        $region25: #{tpu_custom_call.1} parent=11 // pred_check
          %p269 = pneg %p142
        $region26: #{tpu_custom_call.1} parent=11 // pred_check_branch
          %271 = sbr.rel (%p269) target = $region28
        $region27: #{tpu_custom_call.1} parent=11 // pred_region
          _
        $region28: #{tpu_custom_call.1} parent=11 // pred_fallthru
          _
        // Predicated region
        $region29: #{tpu_custom_call.1} parent=11 // pred_check
          %p272 = pneg %p163
        $region30: #{tpu_custom_call.1} parent=11 // pred_check_branch
          %274 = sbr.rel (%p272) target = $region32
        $region31: #{tpu_custom_call.1} parent=11 // pred_region
          _
        $region32: #{tpu_custom_call.1} parent=11 // pred_fallthru
          _
        // Predicated region
        $region33: #{tpu_custom_call.1} parent=11 // pred_check
          %p275 = pneg %p189
        $region34: #{tpu_custom_call.1} parent=11 // pred_check_branch
          %277 = sbr.rel (%p275) target = $region36
        $region35: #{tpu_custom_call.1} parent=11 // pred_region
          %p278 = scmp.lt.s32.totalorder %s27, 0
          %s279 = scalar_select %p278, %s27, 0
          %s280 = smul.addr %s279, 8
          %s281 = scalar_lea.vmem %s6, %s280
        $region36: #{tpu_custom_call.1} parent=11 // pred_fallthru
          _
      $region12: #{tpu_custom_call.1} parent=5 // pred_fallthru
        _
      %p282 = scmp.lt.s32.totalorder %s18, 3
      // Predicated region
      $region37: #{tpu_custom_call.1} parent=5 // pred_check
        %p283 = pneg %p282
      $region38: #{tpu_custom_call.1} parent=5 // pred_check_branch
        %285 = sbr.rel (%p283) target = $region40
      $region39: #{tpu_custom_call.1} parent=5 // pred_region
        // Predicated region
        $region41: #{tpu_custom_call.1} parent=39 // pred_check
          %p286 = pneg %p52
        $region42: #{tpu_custom_call.1} parent=39 // pred_check_branch
          %288 = sbr.rel (%p286) target = $region44
        $region43: #{tpu_custom_call.1} parent=39 // pred_region
          %s289 = smul.u32 4, %s26
          %p290 = scmp.lt.s32.totalorder %s289, 11
          %s291 = scalar_select %p290, %s289, 11
          %p292 = scmp.lt.s32.totalorder %s25, 0
          %s293 = scalar_select %p292, %s25, 0
          %s294 = sadd.s32 %s293, %s291
          %s295 = smul.addr %s294, 8
          %s296 = scalar_lea.vmem %s0, %s295
          %s297 = smul.u32 4, %s26
        $region44: #{tpu_custom_call.1} parent=39 // pred_fallthru
          _
      $region40: #{tpu_custom_call.1} parent=5 // pred_fallthru
        _
      %p298 = scmp.le.s32.totalorder 1, %s18
      %p299 = scmp.lt.s32.totalorder %s18, 4
      %p300 = pnand %p298, %p299
      %p301 = pneg %p300
      // Predicated region
      $region45: #{tpu_custom_call.1} parent=5 // pred_check
        _
      $region46: #{tpu_custom_call.1} parent=5 // pred_check_branch
        %303 = sbr.rel (%p300) target = $region48
      $region47: #{tpu_custom_call.1} parent=5 // pred_region
        %s304 = ssub.s32 %s18, 1
        %s305 = smul.u32 4, %s28
        %p306 = scmp.lt.s32.totalorder %s305, 11
        %s307 = scalar_select %p306, %s305, 11
        %p308 = scmp.lt.s32.totalorder %s27, 0
        %s309 = scalar_select %p308, %s27, 0
        %s310 = sadd.s32 %s309, %s307
        %s311 = smul.addr %s310, 8
        %s312 = scalar_lea.vmem %s0, %s311
        %p313 = pneg %p58
        %p314 = pneg %p55
        %p315 = pneg %p79
        %p316 = pneg %p76
        %p317 = pneg %p100
        %p318 = pneg %p97
        %p319 = pneg %p121
        %p320 = pneg %p118
        %p321 = pneg %p142
        %p322 = pneg %p139
        %p323 = pneg %p163
        %p324 = pneg %p160
        %p325 = scmp.lt.s32.totalorder %s27, 0
        %s326 = scalar_select %p325, %s27, 0
        %s327 = smul.addr %s326, 8
        %s328 = scalar_lea.vmem %s6, %s327
        %p329 = pneg %p189
        %p330 = pneg %p186
        %p331 = pneg %p219
        %p332 = pneg %p216
        %s333 = smul.u32 %s27, 3
        %s334 = sadd.s32 %s333, %s28
        %s335 = smul.u32 4, %s334
        %p336 = scmp.lt.s32.totalorder %s335, 11
        %s337 = scalar_select %p336, %s335, 11
        %s338 = smul.addr %s337, 8
        %s339 = scalar_lea.vmem %s7, %s338
        %p340 = pneg %p245
        %p341 = pneg %p242
        %s342 = smul.u32 4, %s28
        %p343 = scmp.lt.s32.totalorder %s342, 11
        %s344 = scalar_select %p343, %s342, 11
        %p345 = scmp.lt.s32.totalorder %s27, 0
        %s346 = scalar_select %p345, %s27, 0
        %s347 = sadd.s32 %s346, %s344
        %s348 = smul.addr %s347, 8
        %s349 = scalar_lea.vmem %s0, %s348
        %s350 = smul.u32 4, %s28
        %p351 = scmp.lt.s32.totalorder %s27, 0
        %s352 = scalar_select %p351, %s27, 0
        %s353 = smul.addr %s352, 8
        %s354 = scalar_lea.vmem %s6, %s353
        %s355 = smul.u32 %s27, 3
        %s356 = sadd.s32 %s355, %s28
        %s357 = smul.u32 4, %s356
        %p358 = scmp.lt.s32.totalorder %s357, 11
        %s359 = scalar_select %p358, %s357, 11
        %s360 = smul.addr %s359, 8
        %s361 = scalar_lea.vmem %s7, %s360
        %s362 = smul.u32 %s27, 3
        %s363 = sadd.s32 %s362, %s28
        %s364 = smul.u32 4, %s363
        %p365 = scmp.eq.s32.totalorder %s28, 0
        // Predicated region
        $region49: #{tpu_custom_call.1} parent=47 // pred_check
          %p366 = pneg %p365
        $region50: #{tpu_custom_call.1} parent=47 // pred_check_branch
          %368 = sbr.rel (%p366) target = $region52
        $region51: #{tpu_custom_call.1} parent=47 // pred_region
          %v369 = vld [vmem:[%s354] sm:$0xff]
          %370 = vst [vmem:[#allocation2] sm:$0xff] %v369
        $region52: #{tpu_custom_call.1} parent=47 // pred_fallthru
          _
        %v371 = vld [vmem:[%s3] sm:$0xff]
        %v372 = vld [vmem:[%s3 + $0x8] sm:$0xff]
        %v373 = vld [vmem:[%s3 + $0x10] sm:$0xff]
        %v374 = vld [vmem:[%s3 + $0x18] sm:$0xff]
        %v375 = vld [vmem:[%s3 + $0x20] sm:$0xff]
        %v376 = vld [vmem:[%s3 + $0x28] sm:$0xff]
        %v377 = vld [vmem:[%s3 + $0x30] sm:$0xff]
        %v378 = vld [vmem:[%s3 + $0x38] sm:$0xff]
        %v379 = vld [vmem:[%s3 + $0x40] sm:$0xff]
        %v380 = vld [vmem:[%s3 + $0x48] sm:$0xff]
        %v381 = vld [vmem:[%s3 + $0x50] sm:$0xff]
        %v382 = vld [vmem:[%s3 + $0x58] sm:$0xff]
        %v383 = vld [vmem:[%s3 + $0x60] sm:$0xff]
        %v384 = vld [vmem:[%s3 + $0x68] sm:$0xff]
        %v385 = vld [vmem:[%s3 + $0x70] sm:$0xff]
        %v386 = vld [vmem:[%s3 + $0x78] sm:$0xff]
        %v387 = vld [vmem:[%s1] sm:$0x1]
        %v388 = vld [vmem:[%s2] sm:$0x1]
        %v389 = vld [vmem:[#allocation2] sm:$0xff]
        %v390 = vld [vmem:[%s349] sm:$0xff]
        %392 = vset.pattern.permute.xlu0 0
        %393 = vperm.xlu0 %392, %v390
        %v394 = vpop.permute.xlu0 %393
        %v397 = vlaneseq
        %v398 = vshrl.u32 %v397, 7
        %v399 = vsub.s32 0, %v398
        %v400 = vrot.slane %v387, %v399
        %v402 = vmul.f32 %v394, %v400
        %v404 = vlaneseq
        %v405 = vshrl.u32 %v404, 7
        %v406 = vsub.s32 0, %v405
        %v407 = vrot.slane %v388, %v406
        %v409 = vadd.f32 %v407, %v402
        %410 = vmatprep.subr.mxu0 0.0
        %411 = vmatpush1.msra.mxu0 %v371
        %412 = vmatprep.subr.mxu0 0.0
        %413 = vmatpush1.msra.mxu0 %v372
        %414 = vmatprep.subr.mxu0 0.0
        %415 = vmatpush1.msra.mxu0 %v373
        %416 = vmatprep.subr.mxu0 0.0
        %417 = vmatpush1.msra.mxu0 %v374
        %418 = vmatprep.subr.mxu0 0.0
        %419 = vmatpush1.msra.mxu0 %v375
        %420 = vmatprep.subr.mxu0 0.0
        %421 = vmatpush1.msra.mxu0 %v376
        %422 = vmatprep.subr.mxu0 0.0
        %423 = vmatpush1.msra.mxu0 %v377
        %424 = vmatprep.subr.mxu0 0.0
        %425 = vmatpush1.msra.mxu0 %v378
        %426 = vmatprep.subr.mxu0 0.0
        %427 = vmatpush1.msra.mxu0 %v379
        %428 = vmatprep.subr.mxu0 0.0
        %429 = vmatpush1.msra.mxu0 %v380
        %430 = vmatprep.subr.mxu0 0.0
        %431 = vmatpush1.msra.mxu0 %v381
        %432 = vmatprep.subr.mxu0 0.0
        %433 = vmatpush1.msra.mxu0 %v382
        %434 = vmatprep.subr.mxu0 0.0
        %435 = vmatpush1.msra.mxu0 %v383
        %436 = vmatprep.subr.mxu0 0.0
        %437 = vmatpush1.msra.mxu0 %v384
        %438 = vmatprep.subr.mxu0 0.0
        %439 = vmatpush1.msra.mxu0 %v385
        %440 = vmatprep.subr.mxu0 0.0
        %441 = vmatpush1.msra.mxu0 %v386
        %442 = vmatprep.subr.mxu0 0.0
        %443 = vmatpush1.msra.mxu0 0.0
        %444 = vmatprep.subr.mxu0 0.0
        %445 = vmatpush1.msra.mxu0 0.0
        %446 = vmatprep.subr.mxu0 0.0
        %447 = vmatpush1.msra.mxu0 0.0
        %448 = vmatprep.subr.mxu0 0.0
        %449 = vmatpush1.msra.mxu0 0.0
        %450 = vmatprep.subr.mxu0 0.0
        %451 = vmatpush1.msra.mxu0 0.0
        %452 = vmatprep.subr.mxu0 0.0
        %453 = vmatpush1.msra.mxu0 0.0
        %454 = vmatprep.subr.mxu0 0.0
        %455 = vmatpush1.msra.mxu0 0.0
        %456 = vmatprep.subr.mxu0 0.0
        %457 = vmatpush1.msra.mxu0 0.0
        %458 = vmatprep.subr.mxu0 0.0
        %459 = vmatpush1.msra.mxu0 0.0
        %460 = vmatprep.subr.mxu0 0.0
        %461 = vmatpush1.msra.mxu0 0.0
        %462 = vmatprep.subr.mxu0 0.0
        %463 = vmatpush1.msra.mxu0 0.0
        %464 = vmatprep.subr.mxu0 0.0
        %465 = vmatpush1.msra.mxu0 0.0
        %466 = vmatprep.subr.mxu0 0.0
        %467 = vmatpush1.msra.mxu0 0.0
        %468 = vmatprep.subr.mxu0 0.0
        %469 = vmatpush1.msra.mxu0 0.0
        %470 = vmatprep.subr.mxu0 0.0
        %471 = vmatpush1.msra.mxu0 0.0
        %472 = vmatprep.subr.mxu0 0.0
        %473 = vmatpush1.msra.mxu0 0.0
        %474 = vmatprep.mubr.f32.mxu0 0.0
        %475 = vmatmul.mubr.f32.gmra.mrb[0].mxu0 %v389
        %v476 = vpop.f32.mrb[0].mxu0
        %v477 = vadd.f32 0.0, %v476
        %v478 = vpop.f32.mrb[0].mxu0
        %479 = vdwg.mxu0
        %v480 = vadd.f32 %v409, %v477
        %v481 = vtanh.pop %v480
        %482 = vst [vmem:[#allocation3] sm:$0xff] %v481
        %s483 = scalar_lea.vmem %s349, 8
        %v484 = vld [vmem:[%s483] sm:$0xff]
        %486 = vset.pattern.permute.xlu0 0
        %487 = vperm.xlu0 %486, %v484
        %v488 = vpop.permute.xlu0 %487
        %v490 = vmul.f32 %v488, %v400
        %v491 = vadd.f32 %v407, %v490
        %492 = vmatprep.subr.mxu0 0.0
        %493 = vmatpush1.msra.mxu0 %v371
        %494 = vmatprep.subr.mxu0 0.0
        %495 = vmatpush1.msra.mxu0 %v372
        %496 = vmatprep.subr.mxu0 0.0
        %497 = vmatpush1.msra.mxu0 %v373
        %498 = vmatprep.subr.mxu0 0.0
        %499 = vmatpush1.msra.mxu0 %v374
        %500 = vmatprep.subr.mxu0 0.0
        %501 = vmatpush1.msra.mxu0 %v375
        %502 = vmatprep.subr.mxu0 0.0
        %503 = vmatpush1.msra.mxu0 %v376
        %504 = vmatprep.subr.mxu0 0.0
        %505 = vmatpush1.msra.mxu0 %v377
        %506 = vmatprep.subr.mxu0 0.0
        %507 = vmatpush1.msra.mxu0 %v378
        %508 = vmatprep.subr.mxu0 0.0
        %509 = vmatpush1.msra.mxu0 %v379
        %510 = vmatprep.subr.mxu0 0.0
        %511 = vmatpush1.msra.mxu0 %v380
        %512 = vmatprep.subr.mxu0 0.0
        %513 = vmatpush1.msra.mxu0 %v381
        %514 = vmatprep.subr.mxu0 0.0
        %515 = vmatpush1.msra.mxu0 %v382
        %516 = vmatprep.subr.mxu0 0.0
        %517 = vmatpush1.msra.mxu0 %v383
        %518 = vmatprep.subr.mxu0 0.0
        %519 = vmatpush1.msra.mxu0 %v384
        %520 = vmatprep.subr.mxu0 0.0
        %521 = vmatpush1.msra.mxu0 %v385
        %522 = vmatprep.subr.mxu0 0.0
        %523 = vmatpush1.msra.mxu0 %v386
        %524 = vmatprep.subr.mxu0 0.0
        %525 = vmatpush1.msra.mxu0 0.0
        %526 = vmatprep.subr.mxu0 0.0
        %527 = vmatpush1.msra.mxu0 0.0
        %528 = vmatprep.subr.mxu0 0.0
        %529 = vmatpush1.msra.mxu0 0.0
        %530 = vmatprep.subr.mxu0 0.0
        %531 = vmatpush1.msra.mxu0 0.0
        %532 = vmatprep.subr.mxu0 0.0
        %533 = vmatpush1.msra.mxu0 0.0
        %534 = vmatprep.subr.mxu0 0.0
        %535 = vmatpush1.msra.mxu0 0.0
        %536 = vmatprep.subr.mxu0 0.0
        %537 = vmatpush1.msra.mxu0 0.0
        %538 = vmatprep.subr.mxu0 0.0
        %539 = vmatpush1.msra.mxu0 0.0
        %540 = vmatprep.subr.mxu0 0.0
        %541 = vmatpush1.msra.mxu0 0.0
        %542 = vmatprep.subr.mxu0 0.0
        %543 = vmatpush1.msra.mxu0 0.0
        %544 = vmatprep.subr.mxu0 0.0
        %545 = vmatpush1.msra.mxu0 0.0
        %546 = vmatprep.subr.mxu0 0.0
        %547 = vmatpush1.msra.mxu0 0.0
        %548 = vmatprep.subr.mxu0 0.0
        %549 = vmatpush1.msra.mxu0 0.0
        %550 = vmatprep.subr.mxu0 0.0
        %551 = vmatpush1.msra.mxu0 0.0
        %552 = vmatprep.subr.mxu0 0.0
        %553 = vmatpush1.msra.mxu0 0.0
        %554 = vmatprep.subr.mxu0 0.0
        %555 = vmatpush1.msra.mxu0 0.0
        %556 = vmatprep.mubr.f32.mxu0 0.0
        %557 = vmatmul.mubr.f32.gmra.mrb[0].mxu0 %v481
        %v558 = vpop.f32.mrb[0].mxu0
        %v559 = vadd.f32 0.0, %v558
        %v560 = vpop.f32.mrb[0].mxu0
        %561 = vdwg.mxu0
        %v562 = vadd.f32 %v491, %v559
        %v563 = vtanh.pop %v562
        %564 = vst [vmem:[#allocation3 + $0x8] sm:$0xff] %v563
        %s565 = scalar_lea.vmem %s349, 16
        %v566 = vld [vmem:[%s565] sm:$0xff]
        %568 = vset.pattern.permute.xlu0 0
        %569 = vperm.xlu0 %568, %v566
        %v570 = vpop.permute.xlu0 %569
        %v572 = vmul.f32 %v570, %v400
        %v573 = vadd.f32 %v407, %v572
        %574 = vmatprep.subr.mxu0 0.0
        %575 = vmatpush1.msra.mxu0 %v371
        %576 = vmatprep.subr.mxu0 0.0
        %577 = vmatpush1.msra.mxu0 %v372
        %578 = vmatprep.subr.mxu0 0.0
        %579 = vmatpush1.msra.mxu0 %v373
        %580 = vmatprep.subr.mxu0 0.0
        %581 = vmatpush1.msra.mxu0 %v374
        %582 = vmatprep.subr.mxu0 0.0
        %583 = vmatpush1.msra.mxu0 %v375
        %584 = vmatprep.subr.mxu0 0.0
        %585 = vmatpush1.msra.mxu0 %v376
        %586 = vmatprep.subr.mxu0 0.0
        %587 = vmatpush1.msra.mxu0 %v377
        %588 = vmatprep.subr.mxu0 0.0
        %589 = vmatpush1.msra.mxu0 %v378
        %590 = vmatprep.subr.mxu0 0.0
        %591 = vmatpush1.msra.mxu0 %v379
        %592 = vmatprep.subr.mxu0 0.0
        %593 = vmatpush1.msra.mxu0 %v380
        %594 = vmatprep.subr.mxu0 0.0
        %595 = vmatpush1.msra.mxu0 %v381
        %596 = vmatprep.subr.mxu0 0.0
        %597 = vmatpush1.msra.mxu0 %v382
        %598 = vmatprep.subr.mxu0 0.0
        %599 = vmatpush1.msra.mxu0 %v383
        %600 = vmatprep.subr.mxu0 0.0
        %601 = vmatpush1.msra.mxu0 %v384
        %602 = vmatprep.subr.mxu0 0.0
        %603 = vmatpush1.msra.mxu0 %v385
        %604 = vmatprep.subr.mxu0 0.0
        %605 = vmatpush1.msra.mxu0 %v386
        %606 = vmatprep.subr.mxu0 0.0
        %607 = vmatpush1.msra.mxu0 0.0
        %608 = vmatprep.subr.mxu0 0.0
        %609 = vmatpush1.msra.mxu0 0.0
        %610 = vmatprep.subr.mxu0 0.0
        %611 = vmatpush1.msra.mxu0 0.0
        %612 = vmatprep.subr.mxu0 0.0
        %613 = vmatpush1.msra.mxu0 0.0
        %614 = vmatprep.subr.mxu0 0.0
        %615 = vmatpush1.msra.mxu0 0.0
        %616 = vmatprep.subr.mxu0 0.0
        %617 = vmatpush1.msra.mxu0 0.0
        %618 = vmatprep.subr.mxu0 0.0
        %619 = vmatpush1.msra.mxu0 0.0
        %620 = vmatprep.subr.mxu0 0.0
        %621 = vmatpush1.msra.mxu0 0.0
        %622 = vmatprep.subr.mxu0 0.0
        %623 = vmatpush1.msra.mxu0 0.0
        %624 = vmatprep.subr.mxu0 0.0
        %625 = vmatpush1.msra.mxu0 0.0
        %626 = vmatprep.subr.mxu0 0.0
        %627 = vmatpush1.msra.mxu0 0.0
        %628 = vmatprep.subr.mxu0 0.0
        %629 = vmatpush1.msra.mxu0 0.0
        %630 = vmatprep.subr.mxu0 0.0
        %631 = vmatpush1.msra.mxu0 0.0
        %632 = vmatprep.subr.mxu0 0.0
        %633 = vmatpush1.msra.mxu0 0.0
        %634 = vmatprep.subr.mxu0 0.0
        %635 = vmatpush1.msra.mxu0 0.0
        %636 = vmatprep.subr.mxu0 0.0
        %637 = vmatpush1.msra.mxu0 0.0
        %638 = vmatprep.mubr.f32.mxu0 0.0
        %639 = vmatmul.mubr.f32.gmra.mrb[0].mxu0 %v563
        %v640 = vpop.f32.mrb[0].mxu0
        %v641 = vadd.f32 0.0, %v640
        %v642 = vpop.f32.mrb[0].mxu0
        %643 = vdwg.mxu0
        %v644 = vadd.f32 %v573, %v641
        %v645 = vtanh.pop %v644
        %646 = vst [vmem:[#allocation3 + $0x10] sm:$0xff] %v645
        %s647 = scalar_lea.vmem %s349, 24
        %v648 = vld [vmem:[%s647] sm:$0xff]
        %650 = vset.pattern.permute.xlu0 0
        %651 = vperm.xlu0 %650, %v648
        %v652 = vpop.permute.xlu0 %651
        %v654 = vmul.f32 %v652, %v400
        %v655 = vadd.f32 %v407, %v654
        %656 = vmatprep.subr.mxu0 0.0
        %657 = vmatpush1.msra.mxu0 %v371
        %658 = vmatprep.subr.mxu0 0.0
        %659 = vmatpush1.msra.mxu0 %v372
        %660 = vmatprep.subr.mxu0 0.0
        %661 = vmatpush1.msra.mxu0 %v373
        %662 = vmatprep.subr.mxu0 0.0
        %663 = vmatpush1.msra.mxu0 %v374
        %664 = vmatprep.subr.mxu0 0.0
        %665 = vmatpush1.msra.mxu0 %v375
        %666 = vmatprep.subr.mxu0 0.0
        %667 = vmatpush1.msra.mxu0 %v376
        %668 = vmatprep.subr.mxu0 0.0
        %669 = vmatpush1.msra.mxu0 %v377
        %670 = vmatprep.subr.mxu0 0.0
        %671 = vmatpush1.msra.mxu0 %v378
        %672 = vmatprep.subr.mxu0 0.0
        %673 = vmatpush1.msra.mxu0 %v379
        %674 = vmatprep.subr.mxu0 0.0
        %675 = vmatpush1.msra.mxu0 %v380
        %676 = vmatprep.subr.mxu0 0.0
        %677 = vmatpush1.msra.mxu0 %v381
        %678 = vmatprep.subr.mxu0 0.0
        %679 = vmatpush1.msra.mxu0 %v382
        %680 = vmatprep.subr.mxu0 0.0
        %681 = vmatpush1.msra.mxu0 %v383
        %682 = vmatprep.subr.mxu0 0.0
        %683 = vmatpush1.msra.mxu0 %v384
        %684 = vmatprep.subr.mxu0 0.0
        %685 = vmatpush1.msra.mxu0 %v385
        %686 = vmatprep.subr.mxu0 0.0
        %687 = vmatpush1.msra.mxu0 %v386
        %688 = vmatprep.subr.mxu0 0.0
        %689 = vmatpush1.msra.mxu0 0.0
        %690 = vmatprep.subr.mxu0 0.0
        %691 = vmatpush1.msra.mxu0 0.0
        %692 = vmatprep.subr.mxu0 0.0
        %693 = vmatpush1.msra.mxu0 0.0
        %694 = vmatprep.subr.mxu0 0.0
        %695 = vmatpush1.msra.mxu0 0.0
        %696 = vmatprep.subr.mxu0 0.0
        %697 = vmatpush1.msra.mxu0 0.0
        %698 = vmatprep.subr.mxu0 0.0
        %699 = vmatpush1.msra.mxu0 0.0
        %700 = vmatprep.subr.mxu0 0.0
        %701 = vmatpush1.msra.mxu0 0.0
        %702 = vmatprep.subr.mxu0 0.0
        %703 = vmatpush1.msra.mxu0 0.0
        %704 = vmatprep.subr.mxu0 0.0
        %705 = vmatpush1.msra.mxu0 0.0
        %706 = vmatprep.subr.mxu0 0.0
        %707 = vmatpush1.msra.mxu0 0.0
        %708 = vmatprep.subr.mxu0 0.0
        %709 = vmatpush1.msra.mxu0 0.0
        %710 = vmatprep.subr.mxu0 0.0
        %711 = vmatpush1.msra.mxu0 0.0
        %712 = vmatprep.subr.mxu0 0.0
        %713 = vmatpush1.msra.mxu0 0.0
        %714 = vmatprep.subr.mxu0 0.0
        %715 = vmatpush1.msra.mxu0 0.0
        %716 = vmatprep.subr.mxu0 0.0
        %717 = vmatpush1.msra.mxu0 0.0
        %718 = vmatprep.subr.mxu0 0.0
        %719 = vmatpush1.msra.mxu0 0.0
        %720 = vmatprep.mubr.f32.mxu0 0.0
        %721 = vmatmul.mubr.f32.gmra.mrb[0].mxu0 %v645
        %v722 = vpop.f32.mrb[0].mxu0
        %v723 = vadd.f32 0.0, %v722
        %v724 = vpop.f32.mrb[0].mxu0
        %725 = vdwg.mxu0
        %v726 = vadd.f32 %v655, %v723
        %v727 = vtanh.pop %v726
        %728 = vst [vmem:[#allocation3 + $0x18] sm:$0xff] %v727
        %729 = vst [vmem:[#allocation2] sm:$0xff] %v727
        %v730 = vld [vmem:[#allocation3] sm:$0xff]
        %v731 = vld [vmem:[#allocation3 + $0x8] sm:$0xff]
        %v732 = vld [vmem:[#allocation3 + $0x10] sm:$0xff]
        %v733 = vld [vmem:[#allocation3 + $0x18] sm:$0xff]
        %v734 = vld [vmem:[%s4] sm:$0xff]
        %v735 = vld [vmem:[%s4 + $0x8] sm:$0xff]
        %v736 = vld [vmem:[%s4 + $0x10] sm:$0xff]
        %v737 = vld [vmem:[%s4 + $0x18] sm:$0xff]
        %v738 = vld [vmem:[%s4 + $0x20] sm:$0xff]
        %v739 = vld [vmem:[%s4 + $0x28] sm:$0xff]
        %v740 = vld [vmem:[%s4 + $0x30] sm:$0xff]
        %v741 = vld [vmem:[%s4 + $0x38] sm:$0xff]
        %v742 = vld [vmem:[%s4 + $0x40] sm:$0xff]
        %v743 = vld [vmem:[%s4 + $0x48] sm:$0xff]
        %v744 = vld [vmem:[%s4 + $0x50] sm:$0xff]
        %v745 = vld [vmem:[%s4 + $0x58] sm:$0xff]
        %v746 = vld [vmem:[%s4 + $0x60] sm:$0xff]
        %v747 = vld [vmem:[%s4 + $0x68] sm:$0xff]
        %v748 = vld [vmem:[%s4 + $0x70] sm:$0xff]
        %v749 = vld [vmem:[%s4 + $0x78] sm:$0xff]
        %v750 = vld [vmem:[#allocation4] sm:$0x1]
        %v752 = vlaneseq
        %v753 = vshrl.u32 %v752, 7
        %v754 = vsub.s32 0, %v753
        %v755 = vrot.slane %v750, %v754
        %757 = vmatprep.subr.mxu0 0.0
        %758 = vmatpush1.msra.mxu0 %v734
        %759 = vmatprep.subr.mxu0 0.0
        %760 = vmatpush1.msra.mxu0 %v735
        %761 = vmatprep.subr.mxu0 0.0
        %762 = vmatpush1.msra.mxu0 %v736
        %763 = vmatprep.subr.mxu0 0.0
        %764 = vmatpush1.msra.mxu0 %v737
        %765 = vmatprep.subr.mxu0 0.0
        %766 = vmatpush1.msra.mxu0 %v738
        %767 = vmatprep.subr.mxu0 0.0
        %768 = vmatpush1.msra.mxu0 %v739
        %769 = vmatprep.subr.mxu0 0.0
        %770 = vmatpush1.msra.mxu0 %v740
        %771 = vmatprep.subr.mxu0 0.0
        %772 = vmatpush1.msra.mxu0 %v741
        %773 = vmatprep.subr.mxu0 0.0
        %774 = vmatpush1.msra.mxu0 %v742
        %775 = vmatprep.subr.mxu0 0.0
        %776 = vmatpush1.msra.mxu0 %v743
        %777 = vmatprep.subr.mxu0 0.0
        %778 = vmatpush1.msra.mxu0 %v744
        %779 = vmatprep.subr.mxu0 0.0
        %780 = vmatpush1.msra.mxu0 %v745
        %781 = vmatprep.subr.mxu0 0.0
        %782 = vmatpush1.msra.mxu0 %v746
        %783 = vmatprep.subr.mxu0 0.0
        %784 = vmatpush1.msra.mxu0 %v747
        %785 = vmatprep.subr.mxu0 0.0
        %786 = vmatpush1.msra.mxu0 %v748
        %787 = vmatprep.subr.mxu0 0.0
        %788 = vmatpush1.msra.mxu0 %v749
        %789 = vmatprep.subr.mxu0 0.0
        %790 = vmatpush1.msra.mxu0 0.0
        %791 = vmatprep.subr.mxu0 0.0
        %792 = vmatpush1.msra.mxu0 0.0
        %793 = vmatprep.subr.mxu0 0.0
        %794 = vmatpush1.msra.mxu0 0.0
        %795 = vmatprep.subr.mxu0 0.0
        %796 = vmatpush1.msra.mxu0 0.0
        %797 = vmatprep.subr.mxu0 0.0
        %798 = vmatpush1.msra.mxu0 0.0
        %799 = vmatprep.subr.mxu0 0.0
        %800 = vmatpush1.msra.mxu0 0.0
        %801 = vmatprep.subr.mxu0 0.0
        %802 = vmatpush1.msra.mxu0 0.0
        %803 = vmatprep.subr.mxu0 0.0
        %804 = vmatpush1.msra.mxu0 0.0
        %805 = vmatprep.subr.mxu0 0.0
        %806 = vmatpush1.msra.mxu0 0.0
        %807 = vmatprep.subr.mxu0 0.0
        %808 = vmatpush1.msra.mxu0 0.0
        %809 = vmatprep.subr.mxu0 0.0
        %810 = vmatpush1.msra.mxu0 0.0
        %811 = vmatprep.subr.mxu0 0.0
        %812 = vmatpush1.msra.mxu0 0.0
        %813 = vmatprep.subr.mxu0 0.0
        %814 = vmatpush1.msra.mxu0 0.0
        %815 = vmatprep.subr.mxu0 0.0
        %816 = vmatpush1.msra.mxu0 0.0
        %817 = vmatprep.subr.mxu0 0.0
        %818 = vmatpush1.msra.mxu0 0.0
        %819 = vmatprep.subr.mxu0 0.0
        %820 = vmatpush1.msra.mxu0 0.0
        %821 = vmatprep.mubr.f32.mxu0 0.0
        %822 = vmatmul.mubr.f32.gmra.mrb[0].mxu0 %v730
        %v823 = vpop.f32.mrb[0].mxu0
        %v824 = vadd.f32 %v755, %v823
        %v825 = vpop.f32.mrb[0].mxu0
        %826 = vmatprep.mubr.f32.mxu0 0.0
        %827 = vmatmul.mubr.f32.gmra.mrb[0].mxu0 %v731
        %v828 = vpop.f32.mrb[0].mxu0
        %v829 = vadd.f32 %v755, %v828
        %v830 = vpop.f32.mrb[0].mxu0
        %831 = vmatprep.mubr.f32.mxu0 0.0
        %832 = vmatmul.mubr.f32.gmra.mrb[0].mxu0 %v732
        %v833 = vpop.f32.mrb[0].mxu0
        %v834 = vadd.f32 %v755, %v833
        %v835 = vpop.f32.mrb[0].mxu0
        %836 = vmatprep.mubr.f32.mxu0 0.0
        %837 = vmatmul.mubr.f32.gmra.mrb[0].mxu0 %v733
        %v838 = vpop.f32.mrb[0].mxu0
        %v839 = vadd.f32 %v755, %v838
        %v840 = vpop.f32.mrb[0].mxu0
        %841 = vdwg.mxu0
        %vm842 = vcmask 7168
        %843 = vst.msk [vmem:[%s361] sm:$0xff] %vm842, %v824
        %844 = vst.msk [vmem:[%s361 + $0x8] sm:$0xff] %vm842, %v829
        %845 = vst.msk [vmem:[%s361 + $0x10] sm:$0xff] %vm842, %v834
        %846 = vst.msk [vmem:[%s361 + $0x18] sm:$0xff] %vm842, %v839
        %p847 = scmp.eq.s32.totalorder %s28, 2
        // Predicated region
        $region53: #{tpu_custom_call.1} parent=47 // pred_check
          %p848 = pneg %p847
        $region54: #{tpu_custom_call.1} parent=47 // pred_check_branch
          %850 = sbr.rel (%p848) target = $region56
        $region55: #{tpu_custom_call.1} parent=47 // pred_region
          %v851 = vld [vmem:[#allocation3 + $0x8] sm:$0xff]
          %852 = vst [vmem:[#allocation5] sm:$0xff] %v851
        $region56: #{tpu_custom_call.1} parent=47 // pred_fallthru
          _
        %s853 = smul.u32 %s27, 3
        %s854 = sadd.s32 %s853, %s28
        %s855 = smul.u32 4, %s854
        %p856 = scmp.lt.s32.totalorder %s855, 11
        %s857 = scalar_select %p856, %s855, 11
        %s858 = smul.addr %s857, 8
        %s859 = scalar_lea.vmem %s7, %s858
        // Predicated region
        $region57: #{tpu_custom_call.1} parent=47 // pred_check
          %p860 = pneg %p216
        $region58: #{tpu_custom_call.1} parent=47 // pred_check_branch
          %862 = sbr.rel (%p860) target = $region60
        $region59: #{tpu_custom_call.1} parent=47 // pred_region
          %s863 = smul.u32 %s27, 3
          %s864 = sadd.s32 %s863, %s28
          %s865 = smul.u32 4, %s864
        $region60: #{tpu_custom_call.1} parent=47 // pred_fallthru
          _
        // Predicated region
        $region61: #{tpu_custom_call.1} parent=47 // pred_check
          %p866 = pneg %p242
        $region62: #{tpu_custom_call.1} parent=47 // pred_check_branch
          %868 = sbr.rel (%p866) target = $region64
        $region63: #{tpu_custom_call.1} parent=47 // pred_region
          %s870 = ssub.s32 128, 128
          %871 = vsyncadd [#allocation6], %s870
          %s872 = smul.addr %s27, 128
          %s873 = scalar_lea.hbm %s8, %s872
          %s875 = sshll.u32 [#allocation5], 4
          %s876 = int_to_ptr.vmem [resolvable:$true] %s875
          %878 = dma.vmem_to_hbm [thread:$0]  %s876, 128, %s873, [#allocation6]
        $region64: #{tpu_custom_call.1} parent=47 // pred_fallthru
          _
        // Predicated region
        $region65: #{tpu_custom_call.1} parent=47 // pred_check
          %p879 = pneg %p242
        $region66: #{tpu_custom_call.1} parent=47 // pred_check_branch
          %881 = sbr.rel (%p879) target = $region68
        $region67: #{tpu_custom_call.1} parent=47 // pred_region
          %882 = dma.done [#allocation6], 128
        $region68: #{tpu_custom_call.1} parent=47 // pred_fallthru
          _
      $region48: #{tpu_custom_call.1} parent=5 // pred_fallthru
        _
      %p883 = scmp.le.s32.totalorder 2, %s18
      // Predicated region
      $region69: #{tpu_custom_call.1} parent=5 // pred_check
        %p884 = pneg %p883
      $region70: #{tpu_custom_call.1} parent=5 // pred_check_branch
        %886 = sbr.rel (%p884) target = $region72
      $region71: #{tpu_custom_call.1} parent=5 // pred_region
        %s887 = ssub.s32 %s18, 2
        // Predicated region
        $region73: #{tpu_custom_call.1} parent=71 // pred_check
          %p888 = pneg %p222
        $region74: #{tpu_custom_call.1} parent=71 // pred_check_branch
          %890 = sbr.rel (%p888) target = $region76
        $region75: #{tpu_custom_call.1} parent=71 // pred_region
          %s891 = smul.u32 %s29, 3
          %s892 = sadd.s32 %s891, %s30
          %s893 = smul.u32 4, %s892
          %p894 = scmp.lt.s32.totalorder %s893, 11
          %s895 = scalar_select %p894, %s893, 11
          %s896 = smul.addr %s895, 8
          %s897 = scalar_lea.vmem %s7, %s896
        $region76: #{tpu_custom_call.1} parent=71 // pred_fallthru
          _
      $region72: #{tpu_custom_call.1} parent=5 // pred_fallthru
        _
    $region6: #{tpu_custom_call.1} parent=1 // loop_footer
      %s22 = sadd.s32 1, %s18
    $region7: #{tpu_custom_call.1} parent=1 // loop_footer_branch
      %17 = sbr.rel target = $region3
    $region8: #{tpu_custom_call.1} parent=1 // loop_exit
      _
    %898 = vsyncpa [#allocation6], 1
    %s899 = scalar_lea.sflag [#allocation6], 1
    %900 = vsyncpa %s899, 1

</llo_original>
